<compile_context>
chip_gen: v6e
topology: v6e:2x2x1
jax: 0.10.0
libtpu: 0.0.40
codegen_flags: <defaults>
</compile_context>

<pallas_src>
import numpy as np
import jax
import jax.numpy as jnp
from jax import lax
from jax.experimental import pallas as pl
from jax.experimental.pallas import tpu as pltpu


# ----------------------------------------------------------------------------
# Small helpers
# ----------------------------------------------------------------------------
def _round_up(x, m):
    return ((x + m - 1) // m) * m


def _pool_matrix(out_size, in_size):
    """AdaptiveAvgPool1d as a matrix P (out, in): pooled = P @ x."""
    P = np.zeros((out_size, in_size), dtype=np.float32)
    for i in range(out_size):
        start = (i * in_size) // out_size
        end = int(np.ceil((i + 1) * in_size / out_size))
        P[i, start:end] = 1.0 / (end - start)
    return P


def _interp_matrix(out_size, in_size):
    """1-D linear interpolation (align_corners=True) matrix U (out, in)."""
    U = np.zeros((out_size, in_size), dtype=np.float32)
    if in_size == 1:
        U[:, 0] = 1.0
        return U
    for h in range(out_size):
        src = h * (in_size - 1) / (out_size - 1) if out_size > 1 else 0.0
        i0 = min(int(np.floor(src)), in_size - 2)
        frac = src - i0
        U[h, i0] += 1.0 - frac
        U[h, i0 + 1] += frac
    return U


def _build_branch_operators(pool_scales, H, W, H_pad, W_p, SSp):
    """Stacked pooling / upsampling operators over the padded flat layout.

    Padded rows/cols are all-zero in both operators so that (a) pooling ignores
    them and (b) the branch values in padded rows/cols are exactly zero, which
    is what the 3x3 conv's zero padding expects at the bottom image edge.
    """
    P_blocks, U_blocks, offs = [], [], []
    off = 0
    for s in pool_scales:
        P = np.kron(_pool_matrix(s, H), _pool_matrix(s, W))      # (s*s, H*W)
        P = np.pad(P.reshape(s * s, H, W),
                   ((0, 0), (0, H_pad - H), (0, W_p - W)))
        P_blocks.append(P.reshape(s * s, H_pad * W_p))
        U = np.kron(_interp_matrix(H, s), _interp_matrix(W, s))  # (H*W, s*s)
        U = np.pad(U.reshape(H, W, s * s),
                   ((0, H_pad - H), (0, W_p - W), (0, 0)))
        U_blocks.append(U.reshape(H_pad * W_p, s * s))
        offs.append(off)
        off += s * s
    SS = off
    pmat = np.zeros((SSp, H_pad * W_p), np.float32)
    pmat[:SS] = np.concatenate(P_blocks, axis=0)
    ustk = np.zeros((H_pad * W_p, SSp), np.float32)
    ustk[:, :SS] = np.concatenate(U_blocks, axis=1)
    return pmat, ustk, offs, SS


# ----------------------------------------------------------------------------
# VMEM-budget-driven tile planning
# ----------------------------------------------------------------------------
def _query_vmem_capacity_bytes():
    try:
        info = pltpu.get_tpu_info()
        cap = getattr(info, "vmem_capacity_bytes", None)
        if cap:
            return int(cap)
    except Exception:
        pass
    return 64 * 1024 * 1024  # v7x per-core size: a safe lower bound


def _fusion_vmem_bytes(thw, W_p, Cin, SSp, tco, isz):
    x_b = 2 * (thw + 2 * W_p) * Cin * isz      # center tile + 2 halo rows (db)
    u_b = 2 * (thw + 2 * W_p) * SSp * isz      # U rows + halos (db)
    w_b = 2 * 9 * Cin * tco * isz              # wx block (assume double-buffered)
    yw_b = 2 * 9 * SSp * tco * isz             # yw block
    o_b = 2 * thw * tco * 4                    # f32 output tile (db)
    tmp = 4 * thw * tco * 4                    # part scratch + shift temporaries
    return x_b + u_b + w_b + yw_b + o_b + tmp + (2 << 20)


def _plan_tiles(H, W_p, Cin, SSp, Cbp, Ccp, isz):
    cap = _query_vmem_capacity_bytes()
    # ~100 MB on 128 MiB parts (v5e/v6e), ~51 MB on 64 MiB parts (v7x), with
    # headroom left for Mosaic internal scratch.
    vmem_limit = max(int(min(cap * 0.8, 100 * 2 ** 20)), 32 * 2 ** 20)
    budget = vmem_limit - (4 << 20)

    # --- fusion kernel: rows-per-tile so the MXU M dim is ~512, plus tco ---
    tco_opts = sorted([c for c in range(128, Ccp + 1, 128) if Ccp % c == 0],
                      reverse=True)                 # prefer nco == 1
    th = max(2, min(-(-512 // W_p), max(H, 2)))
    tco = None
    while True:
        tco = next((c for c in tco_opts
                    if _fusion_vmem_bytes(th * W_p, W_p, Cin, SSp, c, isz)
                    <= budget), None)
        if tco is not None or th <= 2:
            break
        th = max(2, th // 2)
    if tco is None:
        tco = tco_opts[-1]
    H_pad = _round_up(max(H, 2), th)
    nh = H_pad // th

    # --- pool kernel: as large a (whole-row) reduction tile as budget allows ---
    k1_static = ((Cin * Cbp + SSp * Cbp + Cbp) * 4 + SSp * Cin * 4
                 + 2 * SSp * Cbp * 4 + (2 << 20))
    thw1 = th * W_p
    for r in range(nh, 0, -1):
        if nh % r:
            continue
        cand = r * th * W_p
        if cand <= 4096 and k1_static + 2 * cand * (Cin + SSp) * isz <= budget:
            thw1 = cand
            break
    return th, tco, H_pad, thw1, vmem_limit


# ----------------------------------------------------------------------------
# Kernel 1: stacked adaptive pooling (HW reduction) + folded 1x1 conv/BN/ReLU
# ----------------------------------------------------------------------------
def _pool_conv_kernel(x_ref, pm_ref, w_ref, b_ref, mask_ref, y_ref, acc_ref):
    t = pl.program_id(1)

    @pl.when(t == 0)
    def _init():
        acc_ref[...] = jnp.zeros_like(acc_ref)

    # (SSp, THW) @ (THW, Cin) accumulated in f32 across the HW grid axis.
    acc_ref[...] += jnp.dot(pm_ref[0], x_ref[0],
                            preferred_element_type=jnp.float32)

    @pl.when(t == pl.num_programs(1) - 1)
    def _finalize():
        # The pooled LHS stays in f32 (weights/bias/mask are f32 too): the
        # finalize matmul is tiny, so no accumulation precision is thrown away.
        y = jnp.dot(acc_ref[...], w_ref[...], preferred_element_type=jnp.float32)
        y = jnp.maximum(y + b_ref[...], 0.0) * mask_ref[...]
        y_ref[0] = y.astype(y_ref.dtype)


def _pool_branch_forward(x_pf, pm_tiled, w_cat, b_cat, mask, thw1, vmem_limit):
    N, HWp, Cin = x_pf.shape
    nt, SSp, _ = pm_tiled.shape
    Cbp = w_cat.shape[1]
    # TODO(synk): on v7x (2 TensorCores/chip) add a second parallel grid axis
    # (split the spatial reduction into per-core halves) so that small-N
    # workloads use both cores; v5e/v6e (1 TC) are unaffected.
    return pl.pallas_call(
        _pool_conv_kernel,
        out_shape=jax.ShapeDtypeStruct((N, SSp, Cbp), jnp.float32),
        grid=(N, nt),
        in_specs=[
            pl.BlockSpec((1, thw1, Cin), lambda n, t: (n, t, 0)),
            pl.BlockSpec((1, SSp, thw1), lambda n, t: (t, 0, 0)),
            pl.BlockSpec((Cin, Cbp), lambda n, t: (0, 0)),
            pl.BlockSpec((1, Cbp), lambda n, t: (0, 0)),
            pl.BlockSpec((SSp, Cbp), lambda n, t: (0, 0)),
        ],
        out_specs=pl.BlockSpec((1, SSp, Cbp), lambda n, t: (n, 0, 0)),
        scratch_shapes=[pltpu.VMEM((SSp, Cin), jnp.float32)],
        compiler_params=pltpu.CompilerParams(
            dimension_semantics=("parallel", "arbitrary"),
            vmem_limit_bytes=vmem_limit),
    )(x_pf, pm_tiled, w_cat, b_cat, mask)


# ----------------------------------------------------------------------------
# Kernel 2: fused bilinear upsample + 3x3 conv + BN + ReLU
#   - branch slab is computed on the fly as U_rows @ yw[tap] (never in HBM)
#   - dy taps via aligned slices + 1-row halos (no per-step ext concat)
#   - dx shift hoisted to one shift + mask per dx (2 per grid step)
#   - taps accumulated into an f32 VMEM scratch ref
# ----------------------------------------------------------------------------
def _make_fusion_kernel(W, W_p, th):
    thw = th * W_p
    body = thw - W_p          # rows of the tile excluding one row (8-aligned)

    def kernel(xc_ref, xu_ref, xd_ref, uc_ref, uu_ref, ud_ref,
               yw_ref, wx_ref, bias_ref, o_ref, part_ref):
        h = pl.program_id(2)
        nh = pl.num_programs(2)
        tco = o_ref.shape[2]

        xc = xc_ref[0]        # (thw, Cin)
        uc = uc_ref[...]      # (thw, SSp)

        # Column masks zero the left/right taps where they would cross an
        # image-row edge (and the cross-row wrap of the flat shift).
        col = lax.broadcasted_iota(jnp.int32, (thw, 1), 0) % W_p
        mask_l = (col != 0).astype(jnp.float32)
        mask_r = (col != (W - 1)).astype(jnp.float32)
        zrow = jnp.zeros((8, tco), jnp.float32)

        def shift_down1(v):   # out[i] = v[i-1]; wrap rows are masked by mask_l
            return jnp.concatenate([zrow, v], axis=0)[7:7 + thw]

        def shift_up1(v):     # out[i] = v[i+1]; wrap rows are masked by mask_r
            return jnp.concatenate([v, zrow], axis=0)[1:1 + thw]

        def tap(dy, dx):
            k = dy * 3 + dx

            def f(xs, us):
                return (jnp.dot(xs, wx_ref[dy, dx],
                                preferred_element_type=jnp.float32)
                        + jnp.dot(us, yw_ref[0, k],
                                  preferred_element_type=jnp.float32))
            return f

        acc = None
        for dx in range(3):
            # dy = 1 (same row): whole tile, initializes the per-dx partial.
            part_ref[...] = tap(1, dx)(xc, uc)
            # dy = 0 (row above): interior rows come from inside the tile ...
            part_ref[pl.ds(W_p, body), :] += tap(0, dx)(xc[:body], uc[:body])

            # ... first row comes from the 1-row top halo (zero when h == 0,
            # matching the conv's zero padding at the top image edge).
            @pl.when(h > 0)
            def _top():
                part_ref[pl.ds(0, W_p), :] += tap(0, dx)(xu_ref[0], uu_ref[...])

            # dy = 2 (row below): interior rows from inside the tile ...
            part_ref[pl.ds(0, body), :] += tap(2, dx)(xc[W_p:], uc[W_p:])

            # ... last row from the 1-row bottom halo.
            @pl.when(h < nh - 1)
            def _bot():
                part_ref[pl.ds(body, W_p), :] += tap(2, dx)(xd_ref[0], ud_ref[...])

            p = part_ref[...]
            if dx == 0:       # kernel column 0 reads input column c-1
                p = shift_down1(p) * mask_l
            elif dx == 2:     # kernel column 2 reads input column c+1
                p = shift_up1(p) * mask_r
            acc = p if acc is None else acc + p

        o_ref[0] = jnp.maximum(acc + bias_ref[...], 0.0).astype(o_ref.dtype)

    return kernel


def _fusion_forward(x_pf, ustk, yw, wx, bias, H_pad, W, W_p, th, tco, vmem_limit):
    N, HWp, Cin = x_pf.shape
    SSp = ustk.shape[1]
    Ccp = wx.shape[3]
    nh = H_pad // th
    nco = Ccp // tco
    thw = th * W_p

    kernel = _make_fusion_kernel(W, W_p, th)
    row_lo = lambda n, co, h: (n, jnp.maximum(h * th - 1, 0), 0)
    row_hi = lambda n, co, h: (n, jnp.minimum(h * th + th, H_pad - 1), 0)
    urow_lo = lambda n, co, h: (jnp.maximum(h * th - 1, 0), 0)
    urow_hi = lambda n, co, h: (jnp.minimum(h * th + th, H_pad - 1), 0)

    # Weight-resident schedule: co outer, h inner (weights / yw / bias blocks
    # are index-map-constant over h and therefore stay put across inner steps).
    return pl.pallas_call(
        kernel,
        out_shape=jax.ShapeDtypeStruct((N, HWp, Ccp), jnp.float32),
        grid=(N, nco, nh),
        in_specs=[
            pl.BlockSpec((1, thw, Cin), lambda n, co, h: (n, h, 0)),
            pl.BlockSpec((1, W_p, Cin), row_lo),
            pl.BlockSpec((1, W_p, Cin), row_hi),
            pl.BlockSpec((thw, SSp), lambda n, co, h: (h, 0)),
            pl.BlockSpec((W_p, SSp), urow_lo),
            pl.BlockSpec((W_p, SSp), urow_hi),
            pl.BlockSpec((1, 9, SSp, tco), lambda n, co, h: (n, 0, 0, co)),
            pl.BlockSpec((3, 3, Cin, tco), lambda n, co, h: (0, 0, 0, co)),
            pl.BlockSpec((1, tco), lambda n, co, h: (0, co)),
        ],
        out_specs=pl.BlockSpec((1, thw, tco), lambda n, co, h: (n, h, co)),
        scratch_shapes=[pltpu.VMEM((thw, tco), jnp.float32)],
        compiler_params=pltpu.CompilerParams(
            dimension_semantics=("parallel", "parallel", "parallel"),
            vmem_limit_bytes=vmem_limit),
    )(x_pf, x_pf, x_pf, ustk, ustk, ustk, yw, wx, bias)


# ----------------------------------------------------------------------------
# Module forward (glue + Pallas calls)
# ----------------------------------------------------------------------------
def pyramid_pooling_module(x_nchw, params, pool_scales=(1, 2, 3, 6), eps=1e-5,
                           compute_dtype=jnp.float32):
    N, Cin, H, W = x_nchw.shape
    n_br = len(pool_scales)
    Cc = params["branches"][0]["w"].shape[0]
    Cb = Cc * n_br
    Cbp = _round_up(Cb, 128)          # lane-dense stacked 1x1 output
    Ccp = _round_up(Cc, 128)          # lane-dense fusion output
    W_p = _round_up(W, 8)             # width padded for aligned row slices
    SS = sum(s * s for s in pool_scales)
    SSp = max(_round_up(SS, 8), 64)
    isz = jnp.dtype(compute_dtype).itemsize

    th, tco, H_pad, thw1, vmem_limit = _plan_tiles(H, W_p, Cin, SSp, Cbp, Ccp, isz)
    HWp = H_pad * W_p

    # channels-last, padded, flattened spatial layout (XLA fuses the
    # transpose + cast + pad into one pass over x).
    # TODO(synk): an NHWC-native entry/exit would remove this extra HBM pass.
    x_nhwc = jnp.transpose(x_nchw, (0, 2, 3, 1)).astype(compute_dtype)
    x_pf = jnp.pad(x_nhwc,
                   ((0, 0), (0, H_pad - H), (0, W_p - W), (0, 0))
                   ).reshape(N, HWp, Cin)

    # pooling / upsampling operators (tiny; built once in numpy).
    pmat, ustk, offs, _ = _build_branch_operators(
        pool_scales, H, W, H_pad, W_p, SSp)
    nt = HWp // thw1
    pm_tiled = jnp.asarray(
        pmat.reshape(SSp, nt, thw1).transpose(1, 0, 2)).astype(compute_dtype)
    ustk_j = jnp.asarray(ustk).astype(compute_dtype)

    # fold eval-mode BatchNorm of every branch 1x1 conv into one stacked matmul.
    w_cols, b_cols = [], []
    for i in range(n_br):
        p = params["branches"][i]
        scale = p["gamma"] / jnp.sqrt(p["var"] + eps)
        w_cols.append((p["w"][:, :, 0, 0] * scale[:, None]).T)     # (Cin, Cc)
        b_cols.append((p["b"] - p["mean"]) * scale + p["beta"])    # (Cc,)
    w_cat = jnp.pad(jnp.concatenate(w_cols, axis=1),
                    ((0, 0), (0, Cbp - Cb))).astype(jnp.float32)
    b_cat = jnp.pad(jnp.concatenate(b_cols), (0, Cbp - Cb))
    b_cat = b_cat.reshape(1, Cbp).astype(jnp.float32)

    mask = np.zeros((SSp, Cbp), np.float32)
    for i, s in enumerate(pool_scales):
        mask[offs[i]:offs[i] + s * s, i * Cc:(i + 1) * Cc] = 1.0
    mask = jnp.asarray(mask)

    y = _pool_branch_forward(x_pf, pm_tiled, w_cat, b_cat, mask, thw1, vmem_limit)

    # fusion 3x3 conv weights: fold BN, split into the x-part and branch-part.
    fp = params["fusion"]
    assert fp["w"].shape[1] == Cin + Cb
    scale = fp["gamma"] / jnp.sqrt(fp["var"] + eps)
    w_hwio = jnp.transpose(fp["w"] * scale[:, None, None, None], (2, 3, 1, 0))
    wx = jnp.pad(w_hwio[:, :, :Cin, :],
                 ((0, 0), (0, 0), (0, 0), (0, Ccp - Cc))).astype(compute_dtype)
    wb = jnp.pad(w_hwio[:, :, Cin:, :],
                 ((0, 0), (0, 0), (0, Cbp - Cb), (0, Ccp - Cc))
                 ).astype(jnp.float32)
    bias = jnp.pad((fp["b"] - fp["mean"]) * scale + fp["beta"], (0, Ccp - Cc))
    bias = bias.reshape(1, Ccp).astype(jnp.float32)

    # Pre-contract the tiny pooled-branch output with the branch half of the
    # 3x3 weights: yw[n, dy*3+dx] = y[n] @ wb[dy, dx]   -> (SSp, Ccp) per tap.
    # Inside the fusion kernel each branch tap is then U_rows @ yw[tap], so the
    # upsampled branch slab (same size as x) never touches HBM.
    yw = jnp.einsum("nsb,yxbo->nyxso", y, wb, precision=lax.Precision.HIGHEST)
    yw = yw.reshape(N, 9, SSp, Ccp).astype(compute_dtype)

    out_pf = _fusion_forward(x_pf, ustk_j, yw, wx, bias,
                             H_pad, W, W_p, th, tco, vmem_limit)

    # Rows >= H, columns >= W and channels >= Cc of out_pf are padding garbage
    # by design; they MUST be sliced off here (never consume out_pf directly).
    out = out_pf.reshape(N, H_pad, W_p, Ccp)[:, :H, :W, :Cc]
    return jnp.transpose(out, (0, 3, 1, 2))                        # NCHW


# ----------------------------------------------------------------------------
# Deterministic parameter init (shapes match the PyTorch module __init__)
# ----------------------------------------------------------------------------
def init_params(key, in_channel, channel, pool_scales):
    keys = iter(jax.random.split(key, 6 * (len(pool_scales) + 1)))

    def conv_bn(cin, cout, kh, kw):
        fan_in = cin * kh * kw
        return dict(
            w=jax.random.normal(next(keys), (cout, cin, kh, kw), jnp.float32)
            / np.sqrt(fan_in),
            b=0.05 * jax.random.normal(next(keys), (cout,), jnp.float32),
            gamma=1.0 + 0.1 * jax.random.normal(next(keys), (cout,), jnp.float32),
            beta=0.1 * jax.random.normal(next(keys), (cout,), jnp.float32),
            mean=0.1 * jax.random.normal(next(keys), (cout,), jnp.float32),
            var=1.0 + 0.1 * jax.random.uniform(next(keys), (cout,), jnp.float32),
        )

    branches = [conv_bn(in_channel, channel, 1, 1) for _ in pool_scales]
    fusion = conv_bn(in_channel + channel * len(pool_scales), channel, 3, 3)
    return dict(branches=branches, fusion=fusion)


# ----------------------------------------------------------------------------
# Pure-JAX reference (independent path: reshape-mean pooling, lax.conv).
# NOTE: reshape-mean pooling requires H, W divisible by every pool scale.
# ----------------------------------------------------------------------------
def reference_forward(x_nchw, params, pool_scales=(1, 2, 3, 6), eps=1e-5):
    N, Cin, H, W = x_nchw.shape
    hp = lax.Precision.HIGHEST
    x = jnp.transpose(x_nchw, (0, 2, 3, 1))                         # NHWC
    branch_outs = []
    for idx, s in enumerate(pool_scales):
        p = params["branches"][idx]
        pooled = x.reshape(N, s, H // s, s, W // s, Cin).mean(axis=(2, 4))
        y = jnp.einsum("nijc,oc->nijo", pooled, p["w"][:, :, 0, 0],
                       precision=hp) + p["b"]
        y = (y - p["mean"]) / jnp.sqrt(p["var"] + eps) * p["gamma"] + p["beta"]
        y = jnp.maximum(y, 0.0)
        uh = jnp.asarray(_interp_matrix(H, s))
        uw = jnp.asarray(_interp_matrix(W, s))
        branch_outs.append(jnp.einsum("hi,wj,nijo->nhwo", uh, uw, y, precision=hp))
    cat = jnp.concatenate([x] + branch_outs, axis=-1)
    fp = params["fusion"]
    w_hwio = jnp.transpose(fp["w"], (2, 3, 1, 0))
    z = lax.conv_general_dilated(
        cat, w_hwio, (1, 1), "SAME",
        dimension_numbers=("NHWC", "HWIO", "NHWC"), precision=hp,
    ) + fp["b"]
    z = (z - fp["mean"]) / jnp.sqrt(fp["var"] + eps) * fp["gamma"] + fp["beta"]
    z = jnp.maximum(z, 0.0)
    return jnp.transpose(z, (0, 3, 1, 2))


if __name__ == "__main__":
    in_channel, channel = 32, 8
    pool_scales = (1, 2, 3, 6)
    N, H, W = 2, 12, 12

    key = jax.random.PRNGKey(0)
    kx, kp = jax.random.split(key)
    x = jax.random.normal(kx, (N, in_channel, H, W), jnp.float32)
    params = init_params(kp, in_channel, channel, pool_scales)

    ref = reference_forward(x, params, pool_scales)

    # f32 path: tight tolerance.
    out_f32 = jax.block_until_ready(
        pyramid_pooling_module(x, params, pool_scales, compute_dtype=jnp.float32))
    assert out_f32.shape == (N, channel, H, W), out_f32.shape
    np.testing.assert_allclose(np.asarray(out_f32), np.asarray(ref),
                               rtol=1e-3, atol=1e-3)

    # bf16 MXU-operand path (f32 accumulation): loose but meaningful tolerance.
    out_bf16 = jax.block_until_ready(
        pyramid_pooling_module(x, params, pool_scales, compute_dtype=jnp.bfloat16))
    assert out_bf16.shape == (N, channel, H, W), out_bf16.shape
    np.testing.assert_allclose(np.asarray(out_bf16), np.asarray(ref),
                               rtol=7e-2, atol=7e-2)

    print("KERNEL_OK")
</pallas_src>

<mosaic_0001>
module attributes {stable_mosaic.version = 11 : i64} {
  func.func @_pool_conv_kernel(%arg0: i32, %arg1: i32, %arg2: memref<1x192x32xf32, #tpu.memory_space<vmem>>, %arg3: memref<1x64x192xf32, #tpu.memory_space<vmem>>, %arg4: memref<32x128xf32, #tpu.memory_space<vmem>>, %arg5: memref<1x128xf32, #tpu.memory_space<vmem>>, %arg6: memref<64x128xf32, #tpu.memory_space<vmem>>, %arg7: memref<1x64x128xf32, #tpu.memory_space<vmem>>, %arg8: memref<64x32xf32, #tpu.memory_space<vmem>>) attributes {dimension_semantics = [#tpu.dimension_semantics<parallel>, #tpu.dimension_semantics<arbitrary>], iteration_bounds = array<i64: 2, 1>, scalar_prefetch = 0 : i64, scratch_operands = 1 : i64, tpu.core_type = #tpu.core_type<tc>, window_params = [{transform_indices = @transform_0, window_bounds = array<i64: 1, 192, 32>}, {transform_indices = @transform_1, window_bounds = array<i64: 1, 64, 192>}, {pipeline_mode = #tpu.pipeline_mode<synchronous>, transform_indices = @transform_2, window_bounds = array<i64: 32, 128>}, {pipeline_mode = #tpu.pipeline_mode<synchronous>, transform_indices = @transform_3, window_bounds = array<i64: 1, 128>}, {pipeline_mode = #tpu.pipeline_mode<synchronous>, transform_indices = @transform_4, window_bounds = array<i64: 64, 128>}, {transform_indices = @transform_5, window_bounds = array<i64: 1, 64, 128>}]} {
    %c0_i32 = arith.constant 0 : i32
    %0 = arith.cmpi eq, %arg1, %c0_i32 : i32
    %1 = arith.extui %0 : i1 to i32
    %c0_i32_0 = arith.constant 0 : i32
    %2 = arith.cmpi ne, %1, %c0_i32_0 : i32
    scf.if %2 {
      %cst_12 = arith.constant 0.000000e+00 : f32
      %14 = vector.broadcast %cst_12 : f32 to vector<64x32xf32>
      %c0_13 = arith.constant 0 : index
      %c0_14 = arith.constant 0 : index
      %15 = vector.load %arg8[%c0_13, %c0_14] : memref<64x32xf32, #tpu.memory_space<vmem>>, vector<64x32xf32>
      tpu.vector_store %arg8[%c0_13, %c0_14], %14 {strides = array<i32>} : memref<64x32xf32, #tpu.memory_space<vmem>>, vector<64x32xf32>,
    } else {
    }
    %c0 = arith.constant 0 : index
    %c0_1 = arith.constant 0 : index
    %3 = vector.load %arg8[%c0, %c0_1] : memref<64x32xf32, #tpu.memory_space<vmem>>, vector<64x32xf32>
    %c0_2 = arith.constant 0 : index
    %c0_3 = arith.constant 0 : index
    %c0_4 = arith.constant 0 : index
    %4 = vector.load %arg3[%c0_2, %c0_3, %c0_4] : memref<1x64x192xf32, #tpu.memory_space<vmem>>, vector<1x64x192xf32>
    %5 = vector.shape_cast %4 : vector<1x64x192xf32> to vector<64x192xf32>
    %c0_5 = arith.constant 0 : index
    %c0_6 = arith.constant 0 : index
    %c0_7 = arith.constant 0 : index
    %6 = vector.load %arg2[%c0_5, %c0_6, %c0_7] : memref<1x192x32xf32, #tpu.memory_space<vmem>>, vector<1x192x32xf32>
    %7 = vector.shape_cast %6 : vector<1x192x32xf32> to vector<192x32xf32>
    %cst = arith.constant dense<0.000000e+00> : vector<64x32xf32>
    %8 = tpu.matmul %5, %7, %cst {dimension_numbers = #tpu.dot_dimension_numbers<[1], [0], [0], [1], [0, 0, 1, 1], [], []>} : vector<64x192xf32>, vector<192x32xf32>, vector<64x32xf32> -> vector<64x32xf32>
    %9 = arith.addf %3, %8 : vector<64x32xf32>
    %c0_8 = arith.constant 0 : index
    %c0_9 = arith.constant 0 : index
    %10 = vector.load %arg8[%c0_8, %c0_9] : memref<64x32xf32, #tpu.memory_space<vmem>>, vector<64x32xf32>
    tpu.vector_store %arg8[%c0_8, %c0_9], %9 {strides = array<i32>} : memref<64x32xf32, #tpu.memory_space<vmem>>, vector<64x32xf32>,
    %c0_i32_10 = arith.constant 0 : i32
    %11 = arith.cmpi eq, %arg1, %c0_i32_10 : i32
    %12 = arith.extui %11 : i1 to i32
    %c0_i32_11 = arith.constant 0 : i32
    %13 = arith.cmpi ne, %12, %c0_i32_11 : i32
    scf.if %13 {
      %c0_12 = arith.constant 0 : index
      %c0_13 = arith.constant 0 : index
      %14 = vector.load %arg8[%c0_12, %c0_13] : memref<64x32xf32, #tpu.memory_space<vmem>>, vector<64x32xf32>
      %c0_14 = arith.constant 0 : index
      %c0_15 = arith.constant 0 : index
      %15 = vector.load %arg4[%c0_14, %c0_15] : memref<32x128xf32, #tpu.memory_space<vmem>>, vector<32x128xf32>
      %cst_16 = arith.constant dense<0.000000e+00> : vector<64x128xf32>
      %16 = tpu.matmul %14, %15, %cst_16 {dimension_numbers = #tpu.dot_dimension_numbers<[1], [0], [0], [1], [0, 0, 1, 1], [], []>} : vector<64x32xf32>, vector<32x128xf32>, vector<64x128xf32> -> vector<64x128xf32>
      %c0_17 = arith.constant 0 : index
      %c0_18 = arith.constant 0 : index
      %17 = vector.load %arg5[%c0_17, %c0_18] : memref<1x128xf32, #tpu.memory_space<vmem>>, vector<1x128xf32>
      %18 = vector.broadcast %17 : vector<1x128xf32> to vector<64x128xf32>
      %19 = arith.addf %16, %18 : vector<64x128xf32>
      %cst_19 = arith.constant 0.000000e+00 : f32
      %20 = vector.broadcast %cst_19 : f32 to vector<64x128xf32>
      %21 = arith.maximumf %19, %20 : vector<64x128xf32>
      %c0_20 = arith.constant 0 : index
      %c0_21 = arith.constant 0 : index
      %22 = vector.load %arg6[%c0_20, %c0_21] : memref<64x128xf32, #tpu.memory_space<vmem>>, vector<64x128xf32>
      %23 = arith.mulf %21, %22 : vector<64x128xf32>
      %c0_22 = arith.constant 0 : index
      %c0_23 = arith.constant 0 : index
      %c0_24 = arith.constant 0 : index
      %24 = vector.load %arg7[%c0_22, %c0_23, %c0_24] : memref<1x64x128xf32, #tpu.memory_space<vmem>>, vector<1x64x128xf32>
      %25 = vector.shape_cast %24 : vector<1x64x128xf32> to vector<64x128xf32>
      %26 = vector.shape_cast %23 : vector<64x128xf32> to vector<1x64x128xf32>
      tpu.vector_store %arg7[%c0_22, %c0_23, %c0_24], %26 {strides = array<i32>} : memref<1x64x128xf32, #tpu.memory_space<vmem>>, vector<1x64x128xf32>,
    } else {
    }
    return
  }
  func.func @transform_0(%arg0: i32, %arg1: i32) -> (i32, i32, i32) {
    %c0_i32 = arith.constant 0 : i32
    %c0_i32_0 = arith.constant 0 : i32
    return %arg0, %arg1, %c0_i32 : i32, i32, i32
  }
  func.func @transform_1(%arg0: i32, %arg1: i32) -> (i32, i32, i32) {
    %c0_i32 = arith.constant 0 : i32
    %c0_i32_0 = arith.constant 0 : i32
    %c0_i32_1 = arith.constant 0 : i32
    return %arg1, %c0_i32, %c0_i32_0 : i32, i32, i32
  }
  func.func @transform_2(%arg0: i32, %arg1: i32) -> (i32, i32) {
    %c0_i32 = arith.constant 0 : i32
    %c0_i32_0 = arith.constant 0 : i32
    %c0_i32_1 = arith.constant 0 : i32
    return %c0_i32, %c0_i32_0 : i32, i32
  }
  func.func @transform_3(%arg0: i32, %arg1: i32) -> (i32, i32) {
    %c0_i32 = arith.constant 0 : i32
    %c0_i32_0 = arith.constant 0 : i32
    %c0_i32_1 = arith.constant 0 : i32
    return %c0_i32, %c0_i32_0 : i32, i32
  }
  func.func @transform_4(%arg0: i32, %arg1: i32) -> (i32, i32) {
    %c0_i32 = arith.constant 0 : i32
    %c0_i32_0 = arith.constant 0 : i32
    %c0_i32_1 = arith.constant 0 : i32
    return %c0_i32, %c0_i32_0 : i32, i32
  }
  func.func @transform_5(%arg0: i32, %arg1: i32) -> (i32, i32, i32) {
    %c0_i32 = arith.constant 0 : i32
    %c0_i32_0 = arith.constant 0 : i32
    %c0_i32_1 = arith.constant 0 : i32
    return %arg0, %c0_i32, %c0_i32_0 : i32, i32, i32
  }
}

</mosaic_0001>

<llo_original>
// kernel: tpu_custom_call.1
$region0: #{tpu_custom_call.1}
  #allocation0 [shape = 'u32[]', space=smem, size = 0x4, offset = 0x4, fixed_abs, tag = 'smem constant byte address 0x4 - core index']
  #allocation1 [shape = 'u32[144,128]{1,0:T(1,128)}', space=vmem, size = 0x12000, scoped, tag = 'internal scratch']
  #allocation2 [shape = 'f32[64,32]{1,0:T(8,128)}', space=vmem, size = 0x8000, scoped, tag = 'scratch operand']
  %s0 = inlined_call_operand.vmem [shape: f32[2,192,32], index: 0, kind: input, shape index: {}]
  %s1 = inlined_call_operand.vmem [shape: f32[1,64,192], index: 1, kind: input, shape index: {}]
  %s2 = inlined_call_operand.vmem [shape: f32[32,128], index: 2, kind: input, shape index: {}]
  %s3 = inlined_call_operand.vmem [shape: f32[1,128], index: 3, kind: input, shape index: {}]
  %s4 = inlined_call_operand.vmem [shape: f32[64,128], index: 4, kind: input, shape index: {}]
  %s5 = inlined_call_operand.hbm [shape: f32[2,64,128], index: 5, kind: output, shape index: {}]
  %s6 = sld [smem:[#allocation0]]
  $region61: #{tpu_custom_call.1} parent=0
    _
  %s8 = ssub.s32 1, %s6
  %s9 = scalar_select 0, %s8, %s6
  $region1: #{tpu_custom_call.1} parent=0
    #allocation3 [shape = 'u8[65536]{0}', space=vmem, size = 0x10000, scoped, tag = 'output window, operand 0']
    #allocation4 [shape = 's32[2]{0}', space=sflag, size = 0x8, scoped, tag = 'scoped memory for tpu_custom_call.1']
    %10 = vsyncpa [#allocation4], 0
    %s11 = scalar_lea.sflag [#allocation4], 1
    %12 = vsyncpa %s11, 0
    loop: start=0, step=1, limit=4
    $region2: #{tpu_custom_call.1} parent=1 // loop_pre_header
      _
    $region3: #{tpu_custom_call.1} parent=1 // loop_header
      %s14 = sphi 0, %s18
      %p15 = scmp.ge.s32.totalorder %s14, 4
      %s21 = sphi 0, %s33
      %s22 = sphi 0, %s29
      %s23 = sphi 0, %s21
      %s24 = sphi 0, %s22
      %s25 = sphi 0, %s23
      %s26 = sphi 0, %s24
      %s38 = sphi 0, %s40
      %s41 = sphi 0, %s38
      %s42 = sphi 0, %s41
      %s58 = sphi 0, %s42
      %s64 = sphi 0, %s66
      %s67 = sphi 0, %s64
      %s68 = sphi 0, %s67
      %s84 = sphi 0, %s68
      %s88 = sphi 0, %s88
      %s90 = sphi 0, %s88
      %s91 = sphi 0, %s90
      %s105 = sphi 0, %s91
      %s109 = sphi 0, %s109
      %s111 = sphi 0, %s109
      %s112 = sphi 0, %s111
      %s126 = sphi 0, %s112
      %s130 = sphi 0, %s130
      %s132 = sphi 0, %s130
      %s133 = sphi 0, %s132
      %s147 = sphi 0, %s133
      %s153 = sphi 0, %s155
      %s156 = sphi 0, %s153
      %s157 = sphi 0, %s156
      %s173 = sphi 0, %s157
    $region4: #{tpu_custom_call.1} parent=1 // loop_header_branch
      %17 = sbr.rel (%p15) target = $region8
    $region5: #{tpu_custom_call.1} parent=1 // loop_body
      %s19 = ssub.s32 %s14, 1
      %s20 = ssub.s32 %s14, 2
      %s27 = sadd.s32 1, %s22
      %p28 = scmp.ge.s32.totalorder %s27, 1
      %s29 = scalar_select %p28, 0, %s27
      %s30 = sadd.s32 1, %s21
      %s31 = scalar_select %p28, %s30, %s21
      %p32 = scmp.ge.s32.totalorder %s31, 2
      %s33 = scalar_select %p32, 0, %s31
      %s34 = ssub.s32 %s21, %s33
      %s35 = ssub.s32 %s22, %s29
      %s36 = sor.u32 %s34, %s35
      %p37 = scmp.eq.s32.totalorder %s36, 0
      %s39 = sadd.s32 %s38, 1
      %s40 = scalar_select %p37, %s38, %s39
      %p43 = pneg %p37
      %p44 = scmp.eq.s32.totalorder %s14, 1
      %p45 = por %p43, %p44
      %p46 = scmp.ne.s32.totalorder %s38, %s41
      %p47 = scmp.eq.s32.totalorder %s14, 0
      %p48 = por %p46, %p47
      %p49 = scmp.ne.s32.totalorder %s38, %s41
      %p50 = scmp.eq.s32.totalorder %s19, 1
      %p51 = por %p49, %p50
      %p52 = scmp.ne.s32.totalorder %s41, %s42
      %p53 = scmp.eq.s32.totalorder %s19, 0
      %p54 = por %p52, %p53
      %p55 = scmp.ne.s32.totalorder %s41, %s42
      %p56 = scmp.eq.s32.totalorder %s20, 1
      %p57 = por %p55, %p56
      %p59 = scmp.ne.s32.totalorder %s42, %s58
      %p60 = scmp.eq.s32.totalorder %s20, 0
      %p61 = por %p59, %p60
      %s62 = ssub.s32 %s22, %s29
      %p63 = scmp.eq.s32.totalorder %s62, 0
      %s65 = sadd.s32 %s64, 1
      %s66 = scalar_select %p63, %s64, %s65
      %p69 = pneg %p63
      %p70 = scmp.eq.s32.totalorder %s14, 1
      %p71 = por %p69, %p70
      %p72 = scmp.ne.s32.totalorder %s64, %s67
      %p73 = scmp.eq.s32.totalorder %s14, 0
      %p74 = por %p72, %p73
      %p75 = scmp.ne.s32.totalorder %s64, %s67
      %p76 = scmp.eq.s32.totalorder %s19, 1
      %p77 = por %p75, %p76
      %p78 = scmp.ne.s32.totalorder %s67, %s68
      %p79 = scmp.eq.s32.totalorder %s19, 0
      %p80 = por %p78, %p79
      %p81 = scmp.ne.s32.totalorder %s67, %s68
      %p82 = scmp.eq.s32.totalorder %s20, 1
      %p83 = por %p81, %p82
      %p85 = scmp.ne.s32.totalorder %s68, %s84
      %p86 = scmp.eq.s32.totalorder %s20, 0
      %p87 = por %p85, %p86
      %s89 = sadd.s32 %s88, 1
      %p92 = scmp.eq.s32.totalorder %s14, 1
      %p93 = scmp.ne.s32.totalorder %s88, %s90
      %p94 = scmp.eq.s32.totalorder %s14, 0
      %p95 = por %p93, %p94
      %p96 = scmp.ne.s32.totalorder %s88, %s90
      %p97 = scmp.eq.s32.totalorder %s19, 1
      %p98 = por %p96, %p97
      %p99 = scmp.ne.s32.totalorder %s90, %s91
      %p100 = scmp.eq.s32.totalorder %s19, 0
      %p101 = por %p99, %p100
      %p102 = scmp.ne.s32.totalorder %s90, %s91
      %p103 = scmp.eq.s32.totalorder %s20, 1
      %p104 = por %p102, %p103
      %p106 = scmp.ne.s32.totalorder %s91, %s105
      %p107 = scmp.eq.s32.totalorder %s20, 0
      %p108 = por %p106, %p107
      %s110 = sadd.s32 %s109, 1
      %p113 = scmp.eq.s32.totalorder %s14, 1
      %p114 = scmp.ne.s32.totalorder %s109, %s111
      %p115 = scmp.eq.s32.totalorder %s14, 0
      %p116 = por %p114, %p115
      %p117 = scmp.ne.s32.totalorder %s109, %s111
      %p118 = scmp.eq.s32.totalorder %s19, 1
      %p119 = por %p117, %p118
      %p120 = scmp.ne.s32.totalorder %s111, %s112
      %p121 = scmp.eq.s32.totalorder %s19, 0
      %p122 = por %p120, %p121
      %p123 = scmp.ne.s32.totalorder %s111, %s112
      %p124 = scmp.eq.s32.totalorder %s20, 1
      %p125 = por %p123, %p124
      %p127 = scmp.ne.s32.totalorder %s112, %s126
      %p128 = scmp.eq.s32.totalorder %s20, 0
      %p129 = por %p127, %p128
      %s131 = sadd.s32 %s130, 1
      %p134 = scmp.eq.s32.totalorder %s14, 1
      %p135 = scmp.ne.s32.totalorder %s130, %s132
      %p136 = scmp.eq.s32.totalorder %s14, 0
      %p137 = por %p135, %p136
      %p138 = scmp.ne.s32.totalorder %s130, %s132
      %p139 = scmp.eq.s32.totalorder %s19, 1
      %p140 = por %p138, %p139
      %p141 = scmp.ne.s32.totalorder %s132, %s133
      %p142 = scmp.eq.s32.totalorder %s19, 0
      %p143 = por %p141, %p142
      %p144 = scmp.ne.s32.totalorder %s132, %s133
      %p145 = scmp.eq.s32.totalorder %s20, 1
      %p146 = por %p144, %p145
      %p148 = scmp.ne.s32.totalorder %s133, %s147
      %p149 = scmp.eq.s32.totalorder %s20, 0
      %p150 = por %p148, %p149
      %s151 = ssub.s32 %s21, %s33
      %p152 = scmp.eq.s32.totalorder %s151, 0
      %s154 = sadd.s32 %s153, 1
      %s155 = scalar_select %p152, %s153, %s154
      %p158 = pneg %p152
      %p159 = scmp.eq.s32.totalorder %s14, 1
      %p160 = por %p158, %p159
      %p161 = scmp.ne.s32.totalorder %s153, %s156
      %p162 = scmp.eq.s32.totalorder %s14, 0
      %p163 = por %p161, %p162
      %p164 = scmp.ne.s32.totalorder %s153, %s156
      %p165 = scmp.eq.s32.totalorder %s19, 1
      %p166 = por %p164, %p165
      %p167 = scmp.ne.s32.totalorder %s156, %s157
      %p168 = scmp.eq.s32.totalorder %s19, 0
      %p169 = por %p167, %p168
      %p170 = scmp.ne.s32.totalorder %s156, %s157
      %p171 = scmp.eq.s32.totalorder %s20, 1
      %p172 = por %p170, %p171
      %p174 = scmp.ne.s32.totalorder %s157, %s173
      %p175 = scmp.eq.s32.totalorder %s20, 0
      %p176 = por %p174, %p175
      %p177 = scmp.le.s32.totalorder 1, %s14
      %p178 = scmp.lt.s32.totalorder %s14, 3
      %p179 = pnand %p177, %p178
      %p180 = pneg %p179
      // Predicated region
      $region9: #{tpu_custom_call.1} parent=5 // pred_check
        _
      $region10: #{tpu_custom_call.1} parent=5 // pred_check_branch
        %182 = sbr.rel (%p179) target = $region12
      $region11: #{tpu_custom_call.1} parent=5 // pred_region
        %s183 = ssub.s32 %s14, 1
        // Predicated region
        $region13: #{tpu_custom_call.1} parent=11 // pred_check
          %p184 = pneg %p80
        $region14: #{tpu_custom_call.1} parent=11 // pred_check_branch
          %186 = sbr.rel (%p184) target = $region16
        $region15: #{tpu_custom_call.1} parent=11 // pred_region
          %p187 = scmp.lt.s32.totalorder %s24, 0
          %s188 = scalar_select %p187, %s24, 0
          %s189 = smul.addr %s188, 16
          %s190 = smul.addr %s189, 8
          %s191 = scalar_lea.vmem %s1, %s190
        $region16: #{tpu_custom_call.1} parent=11 // pred_fallthru
          _
        // Predicated region
        $region17: #{tpu_custom_call.1} parent=11 // pred_check
          %p192 = pneg %p101
        $region18: #{tpu_custom_call.1} parent=11 // pred_check_branch
          %194 = sbr.rel (%p192) target = $region20
        $region19: #{tpu_custom_call.1} parent=11 // pred_region
          _
        $region20: #{tpu_custom_call.1} parent=11 // pred_fallthru
          _
        // Predicated region
        $region21: #{tpu_custom_call.1} parent=11 // pred_check
          %p195 = pneg %p122
        $region22: #{tpu_custom_call.1} parent=11 // pred_check_branch
          %197 = sbr.rel (%p195) target = $region24
        $region23: #{tpu_custom_call.1} parent=11 // pred_region
          _
        $region24: #{tpu_custom_call.1} parent=11 // pred_fallthru
          _
        // Predicated region
        $region25: #{tpu_custom_call.1} parent=11 // pred_check
          %p198 = pneg %p143
        $region26: #{tpu_custom_call.1} parent=11 // pred_check_branch
          %200 = sbr.rel (%p198) target = $region28
        $region27: #{tpu_custom_call.1} parent=11 // pred_region
          _
        $region28: #{tpu_custom_call.1} parent=11 // pred_fallthru
          _
      $region12: #{tpu_custom_call.1} parent=5 // pred_fallthru
        _
      %p201 = scmp.lt.s32.totalorder %s14, 2
      // Predicated region
      $region29: #{tpu_custom_call.1} parent=5 // pred_check
        %p202 = pneg %p201
      $region30: #{tpu_custom_call.1} parent=5 // pred_check_branch
        %204 = sbr.rel (%p202) target = $region32
      $region31: #{tpu_custom_call.1} parent=5 // pred_region
        // Predicated region
        $region33: #{tpu_custom_call.1} parent=31 // pred_check
          %p205 = pneg %p48
        $region34: #{tpu_custom_call.1} parent=31 // pred_check_branch
          %207 = sbr.rel (%p205) target = $region36
        $region35: #{tpu_custom_call.1} parent=31 // pred_region
          %s208 = smul.u32 24, %s22
          %p209 = scmp.lt.s32.totalorder %s21, 1
          %s210 = scalar_select %p209, %s21, 1
          %p211 = scmp.lt.s32.totalorder %s208, 23
          %s212 = scalar_select %p211, %s208, 23
          %s213 = smul.addr %s210, 24
          %s214 = sadd.s32 %s212, %s213
          %s215 = smul.addr %s214, 8
          %s216 = scalar_lea.vmem %s0, %s215
          %s217 = smul.u32 24, %s22
        $region36: #{tpu_custom_call.1} parent=31 // pred_fallthru
          _
      $region32: #{tpu_custom_call.1} parent=5 // pred_fallthru
        _
      %p218 = scmp.le.s32.totalorder 1, %s14
      %p219 = scmp.lt.s32.totalorder %s14, 3
      %p220 = pnand %p218, %p219
      %p221 = pneg %p220
      // Predicated region
      $region37: #{tpu_custom_call.1} parent=5 // pred_check
        _
      $region38: #{tpu_custom_call.1} parent=5 // pred_check_branch
        %223 = sbr.rel (%p220) target = $region40
      $region39: #{tpu_custom_call.1} parent=5 // pred_region
        %s224 = ssub.s32 %s14, 1
        %s225 = smul.u32 24, %s24
        %p226 = scmp.lt.s32.totalorder %s23, 1
        %s227 = scalar_select %p226, %s23, 1
        %p228 = scmp.lt.s32.totalorder %s225, 23
        %s229 = scalar_select %p228, %s225, 23
        %s230 = smul.addr %s227, 24
        %s231 = sadd.s32 %s229, %s230
        %s232 = smul.addr %s231, 8
        %s233 = scalar_lea.vmem %s0, %s232
        %p234 = pneg %p54
        %p235 = pneg %p51
        %p236 = scmp.lt.s32.totalorder %s24, 0
        %s237 = scalar_select %p236, %s24, 0
        %s238 = smul.addr %s237, 16
        %s239 = smul.addr %s238, 8
        %s240 = scalar_lea.vmem %s1, %s239
        %p241 = pneg %p80
        %p242 = pneg %p77
        %p243 = pneg %p101
        %p244 = pneg %p98
        %p245 = pneg %p122
        %p246 = pneg %p119
        %p247 = pneg %p143
        %p248 = pneg %p140
        %p249 = pneg %p169
        %p250 = pneg %p166
        %s251 = sand.u32 %s156, 1
        %s252 = scalar_lea.sflag [#allocation4], %s251
        %s253 = sand.u32 %s156, 1
        %s254 = smul.addr %s253, 64
        %s255 = scalar_lea.vmem [#allocation3], %s254
        %s256 = smul.u32 24, %s24
        %p257 = scmp.lt.s32.totalorder %s23, 1
        %s258 = scalar_select %p257, %s23, 1
        %p259 = scmp.lt.s32.totalorder %s256, 23
        %s260 = scalar_select %p259, %s256, 23
        %s261 = smul.addr %s258, 24
        %s262 = sadd.s32 %s260, %s261
        %s263 = smul.addr %s262, 8
        %s264 = scalar_lea.vmem %s0, %s263
        %s265 = smul.u32 24, %s24
        %p266 = scmp.lt.s32.totalorder %s24, 0
        %s267 = scalar_select %p266, %s24, 0
        %s268 = smul.addr %s267, 16
        %s269 = smul.addr %s268, 8
        %s270 = scalar_lea.vmem %s1, %s269
        %p271 = scmp.eq.s32.totalorder %s24, 0
        // Predicated region
        $region41: #{tpu_custom_call.1} parent=39 // pred_check
          %p272 = pneg %p271
        $region42: #{tpu_custom_call.1} parent=39 // pred_check_branch
          %274 = sbr.rel (%p272) target = $region44
        $region43: #{tpu_custom_call.1} parent=39 // pred_region
          %vm275 = vcmask 261120
          %276 = vst.msk [vmem:[#allocation2] sm:$0xff] %vm275, 0.0
          %277 = vst.msk [vmem:[#allocation2 + $0x8] sm:$0xff] %vm275, 0.0
          %278 = vst.msk [vmem:[#allocation2 + $0x10] sm:$0xff] %vm275, 0.0
          %279 = vst.msk [vmem:[#allocation2 + $0x18] sm:$0xff] %vm275, 0.0
          %280 = vst.msk [vmem:[#allocation2 + $0x20] sm:$0xff] %vm275, 0.0
          %281 = vst.msk [vmem:[#allocation2 + $0x28] sm:$0xff] %vm275, 0.0
          %282 = vst.msk [vmem:[#allocation2 + $0x30] sm:$0xff] %vm275, 0.0
          %283 = vst.msk [vmem:[#allocation2 + $0x38] sm:$0xff] %vm275, 0.0
        $region44: #{tpu_custom_call.1} parent=39 // pred_fallthru
          _
        %v284 = vld [vmem:[#allocation2] sm:$0xff]
        %v285 = vld [vmem:[#allocation2 + $0x8] sm:$0xff]
        %v286 = vld [vmem:[#allocation2 + $0x10] sm:$0xff]
        %v287 = vld [vmem:[#allocation2 + $0x18] sm:$0xff]
        %v288 = vld [vmem:[#allocation2 + $0x20] sm:$0xff]
        %v289 = vld [vmem:[#allocation2 + $0x28] sm:$0xff]
        %v290 = vld [vmem:[#allocation2 + $0x30] sm:$0xff]
        %v291 = vld [vmem:[#allocation2 + $0x38] sm:$0xff]
        %v292 = vld [vmem:[%s270] sm:$0xff]
        %v293 = vld [vmem:[%s270 + $0x8] sm:$0xff]
        %v294 = vld [vmem:[%s270 + $0x10] sm:$0xff]
        %v295 = vld [vmem:[%s270 + $0x18] sm:$0xff]
        %v296 = vld [vmem:[%s270 + $0x20] sm:$0xff]
        %v297 = vld [vmem:[%s270 + $0x28] sm:$0xff]
        %v298 = vld [vmem:[%s270 + $0x30] sm:$0xff]
        %v299 = vld [vmem:[%s270 + $0x38] sm:$0xff]
        %v300 = vld [vmem:[%s270 + $0x40] sm:$0xff]
        %v301 = vld [vmem:[%s270 + $0x48] sm:$0xff]
        %v302 = vld [vmem:[%s270 + $0x50] sm:$0xff]
        %v303 = vld [vmem:[%s270 + $0x58] sm:$0xff]
        %v304 = vld [vmem:[%s270 + $0x60] sm:$0xff]
        %v305 = vld [vmem:[%s270 + $0x68] sm:$0xff]
        %v306 = vld [vmem:[%s270 + $0x70] sm:$0xff]
        %v307 = vld [vmem:[%s270 + $0x78] sm:$0xff]
        %v308 = vld [vmem:[%s264] sm:$0xff]
        %v309 = vld [vmem:[%s264 + $0x8] sm:$0xff]
        %v310 = vld [vmem:[%s264 + $0x10] sm:$0xff]
        %v311 = vld [vmem:[%s264 + $0x18] sm:$0xff]
        %v312 = vld [vmem:[%s264 + $0x20] sm:$0xff]
        %v313 = vld [vmem:[%s264 + $0x28] sm:$0xff]
        %v314 = vld [vmem:[%s264 + $0x30] sm:$0xff]
        %v315 = vld [vmem:[%s264 + $0x38] sm:$0xff]
        %v316 = vld [vmem:[%s264 + $0x40] sm:$0xff]
        %v317 = vld [vmem:[%s264 + $0x48] sm:$0xff]
        %v318 = vld [vmem:[%s264 + $0x50] sm:$0xff]
        %v319 = vld [vmem:[%s264 + $0x58] sm:$0xff]
        %v320 = vld [vmem:[%s264 + $0x60] sm:$0xff]
        %v321 = vld [vmem:[%s264 + $0x68] sm:$0xff]
        %v322 = vld [vmem:[%s264 + $0x70] sm:$0xff]
        %v323 = vld [vmem:[%s264 + $0x78] sm:$0xff]
        %v324 = vld [vmem:[%s264 + $0x80] sm:$0xff]
        %v325 = vld [vmem:[%s264 + $0x88] sm:$0xff]
        %v326 = vld [vmem:[%s264 + $0x90] sm:$0xff]
        %v327 = vld [vmem:[%s264 + $0x98] sm:$0xff]
        %v328 = vld [vmem:[%s264 + $0xa0] sm:$0xff]
        %v329 = vld [vmem:[%s264 + $0xa8] sm:$0xff]
        %v330 = vld [vmem:[%s264 + $0xb0] sm:$0xff]
        %v331 = vld [vmem:[%s264 + $0xb8] sm:$0xff]
        %vm332 = vcmask 523264
        %v334 = vsel %vm332, %v293, 0
        %v337 = vsel %vm332, %v295, 0
        %v340 = vsel %vm332, %v297, 0
        %v343 = vsel %vm332, %v299, 0
        %v346 = vsel %vm332, %v301, 0
        %v349 = vsel %vm332, %v303, 0
        %v352 = vsel %vm332, %v305, 0
        %v355 = vsel %vm332, %v307, 0
        %357 = vmatprep.subr.mxu0 0.0
        %358 = vmatpush1.msra.mxu0 %v323
        %359 = vmatprep.subr.mxu0 0.0
        %360 = vmatpush1.msra.mxu0 %v322
        %361 = vmatprep.subr.mxu0 0.0
        %362 = vmatpush1.msra.mxu0 %v321
        %363 = vmatprep.subr.mxu0 0.0
        %364 = vmatpush1.msra.mxu0 %v320
        %365 = vmatprep.subr.mxu0 0.0
        %366 = vmatpush1.msra.mxu0 %v319
        %367 = vmatprep.subr.mxu0 0.0
        %368 = vmatpush1.msra.mxu0 %v318
        %369 = vmatprep.subr.mxu0 0.0
        %370 = vmatpush1.msra.mxu0 %v317
        %371 = vmatprep.subr.mxu0 0.0
        %372 = vmatpush1.msra.mxu0 %v316
        %373 = vmatprep.subr.mxu0 0.0
        %374 = vmatpush1.msra.mxu0 %v315
        %375 = vmatprep.subr.mxu0 0.0
        %376 = vmatpush1.msra.mxu0 %v314
        %377 = vmatprep.subr.mxu0 0.0
        %378 = vmatpush1.msra.mxu0 %v313
        %379 = vmatprep.subr.mxu0 0.0
        %380 = vmatpush1.msra.mxu0 %v312
        %381 = vmatprep.subr.mxu0 0.0
        %382 = vmatpush1.msra.mxu0 %v311
        %383 = vmatprep.subr.mxu0 0.0
        %384 = vmatpush1.msra.mxu0 %v310
        %385 = vmatprep.subr.mxu0 0.0
        %386 = vmatpush1.msra.mxu0 %v309
        %387 = vmatprep.subr.mxu0 0.0
        %388 = vmatpush1.msra.mxu0 %v308
        %389 = vmatprep.subr.mxu0 0.0
        %390 = vmatpush2.msra.mxu0 0.0
        %391 = vmatprep.subr.mxu0 0.0
        %392 = vmatpush2.msra.mxu0 0.0
        %393 = vmatprep.subr.mxu0 0.0
        %394 = vmatpush2.msra.mxu0 0.0
        %395 = vmatprep.subr.mxu0 0.0
        %396 = vmatpush2.msra.mxu0 0.0
        %397 = vmatprep.subr.mxu0 0.0
        %398 = vmatpush2.msra.mxu0 0.0
        %399 = vmatprep.subr.mxu0 0.0
        %400 = vmatpush2.msra.mxu0 0.0
        %401 = vmatprep.subr.mxu0 0.0
        %402 = vmatpush2.msra.mxu0 0.0
        %403 = vmatprep.subr.mxu0 0.0
        %404 = vmatpush2.msra.mxu0 0.0
        %405 = vmatprep.subr.mxu0 0.0
        %406 = vmatpush2.msra.mxu0 %v331
        %407 = vmatprep.subr.mxu0 0.0
        %408 = vmatpush2.msra.mxu0 %v330
        %409 = vmatprep.subr.mxu0 0.0
        %410 = vmatpush2.msra.mxu0 %v329
        %411 = vmatprep.subr.mxu0 0.0
        %412 = vmatpush2.msra.mxu0 %v328
        %413 = vmatprep.subr.mxu0 0.0
        %414 = vmatpush2.msra.mxu0 %v327
        %415 = vmatprep.subr.mxu0 0.0
        %416 = vmatpush2.msra.mxu0 %v326
        %417 = vmatprep.subr.mxu0 0.0
        %418 = vmatpush2.msra.mxu0 %v325
        %419 = vmatprep.subr.mxu0 0.0
        %420 = vmatpush2.msra.mxu0 %v324
        %421 = vmatprep.mubr.f32.mxu0 %v334
        %422 = vmatmul.mubr.f32.gmra.mxu0 %v292
        %v423 = vpop.f32.mrf.mxu0
        %v424 = vadd.f32 0.0, %v423
        %v425 = vpop.f32.mrf.mxu0
        %426 = vmatprep.mubr.f32.mxu0 %v337
        %427 = vmatmul.mubr.f32.gmra.mxu0 %v294
        %v428 = vpop.f32.mrf.mxu0
        %v429 = vadd.f32 0.0, %v428
        %v430 = vpop.f32.mrf.mxu0
        %431 = vmatprep.mubr.f32.mxu0 %v340
        %432 = vmatmul.mubr.f32.gmra.mxu0 %v296
        %v433 = vpop.f32.mrf.mxu0
        %v434 = vadd.f32 0.0, %v433
        %v435 = vpop.f32.mrf.mxu0
        %436 = vmatprep.mubr.f32.mxu0 %v343
        %437 = vmatmul.mubr.f32.gmra.mxu0 %v298
        %v438 = vpop.f32.mrf.mxu0
        %v439 = vadd.f32 0.0, %v438
        %v440 = vpop.f32.mrf.mxu0
        %441 = vmatprep.mubr.f32.mxu0 %v346
        %442 = vmatmul.mubr.f32.gmra.mxu0 %v300
        %v443 = vpop.f32.mrf.mxu0
        %v444 = vadd.f32 0.0, %v443
        %v445 = vpop.f32.mrf.mxu0
        %446 = vmatprep.mubr.f32.mxu0 %v349
        %447 = vmatmul.mubr.f32.gmra.mxu0 %v302
        %v448 = vpop.f32.mrf.mxu0
        %v449 = vadd.f32 0.0, %v448
        %v450 = vpop.f32.mrf.mxu0
        %451 = vmatprep.mubr.f32.mxu0 %v352
        %452 = vmatmul.mubr.f32.gmra.mxu0 %v304
        %v453 = vpop.f32.mrf.mxu0
        %v454 = vadd.f32 0.0, %v453
        %v455 = vpop.f32.mrf.mxu0
        %456 = vmatprep.mubr.f32.mxu0 %v355
        %457 = vmatmul.mubr.f32.gmra.mxu0 %v306
        %v458 = vpop.f32.mrf.mxu0
        %v459 = vadd.f32 0.0, %v458
        %v460 = vpop.f32.mrf.mxu0
        %461 = vdwg.mxu0
        %v462 = vadd.f32 %v284, %v424
        %v463 = vadd.f32 %v285, %v429
        %v464 = vadd.f32 %v286, %v434
        %v465 = vadd.f32 %v287, %v439
        %v466 = vadd.f32 %v288, %v444
        %v467 = vadd.f32 %v289, %v449
        %v468 = vadd.f32 %v290, %v454
        %v469 = vadd.f32 %v291, %v459
        %vm470 = vcmask 261120
        %471 = vst.msk [vmem:[#allocation2] sm:$0xff] %vm470, %v462
        %472 = vst.msk [vmem:[#allocation2 + $0x8] sm:$0xff] %vm470, %v463
        %473 = vst.msk [vmem:[#allocation2 + $0x10] sm:$0xff] %vm470, %v464
        %474 = vst.msk [vmem:[#allocation2 + $0x18] sm:$0xff] %vm470, %v465
        %475 = vst.msk [vmem:[#allocation2 + $0x20] sm:$0xff] %vm470, %v466
        %476 = vst.msk [vmem:[#allocation2 + $0x28] sm:$0xff] %vm470, %v467
        %477 = vst.msk [vmem:[#allocation2 + $0x30] sm:$0xff] %vm470, %v468
        %478 = vst.msk [vmem:[#allocation2 + $0x38] sm:$0xff] %vm470, %v469
        // Predicated region
        $region45: #{tpu_custom_call.1} parent=39 // pred_check
          %p479 = pneg %p271
        $region46: #{tpu_custom_call.1} parent=39 // pred_check_branch
          %481 = sbr.rel (%p479) target = $region48
        $region47: #{tpu_custom_call.1} parent=39 // pred_region
          %v482 = vld [vmem:[#allocation2] sm:$0xff]
          %v483 = vld [vmem:[#allocation2 + $0x8] sm:$0xff]
          %v484 = vld [vmem:[#allocation2 + $0x10] sm:$0xff]
          %v485 = vld [vmem:[#allocation2 + $0x18] sm:$0xff]
          %v486 = vld [vmem:[#allocation2 + $0x20] sm:$0xff]
          %v487 = vld [vmem:[#allocation2 + $0x28] sm:$0xff]
          %v488 = vld [vmem:[#allocation2 + $0x30] sm:$0xff]
          %v489 = vld [vmem:[#allocation2 + $0x38] sm:$0xff]
          %v490 = vld [vmem:[%s2] sm:$0xff]
          %v491 = vld [vmem:[%s2 + $0x8] sm:$0xff]
          %v492 = vld [vmem:[%s2 + $0x10] sm:$0xff]
          %v493 = vld [vmem:[%s2 + $0x18] sm:$0xff]
          %v494 = vld [vmem:[%s3] sm:$0x1]
          %v496 = vlaneseq
          %v497 = vshrl.u32 %v496, 7
          %v498 = vsub.s32 0, %v497
          %v499 = vrot.slane %v494, %v498
          %v502 = vsel %vm470, %v482, 0
          %v505 = vsel %vm470, %v483, 0
          %v508 = vsel %vm470, %v484, 0
          %v511 = vsel %vm470, %v485, 0
          %v514 = vsel %vm470, %v486, 0
          %v517 = vsel %vm470, %v487, 0
          %v520 = vsel %vm470, %v488, 0
          %v523 = vsel %vm470, %v489, 0
          %525 = vmatprep.subr.mxu0 0.0
          %526 = vmatpush1.msra.mxu0 0.0
          %527 = vmatprep.subr.mxu0 0.0
          %528 = vmatpush1.msra.mxu0 0.0
          %529 = vmatprep.subr.mxu0 0.0
          %530 = vmatpush1.msra.mxu0 0.0
          %531 = vmatprep.subr.mxu0 0.0
          %532 = vmatpush1.msra.mxu0 0.0
          %533 = vmatprep.subr.mxu0 0.0
          %534 = vmatpush1.msra.mxu0 0.0
          %535 = vmatprep.subr.mxu0 0.0
          %536 = vmatpush1.msra.mxu0 0.0
          %537 = vmatprep.subr.mxu0 0.0
          %538 = vmatpush1.msra.mxu0 0.0
          %539 = vmatprep.subr.mxu0 0.0
          %540 = vmatpush1.msra.mxu0 0.0
          %541 = vmatprep.subr.mxu0 0.0
          %542 = vmatpush1.msra.mxu0 0.0
          %543 = vmatprep.subr.mxu0 0.0
          %544 = vmatpush1.msra.mxu0 0.0
          %545 = vmatprep.subr.mxu0 0.0
          %546 = vmatpush1.msra.mxu0 0.0
          %547 = vmatprep.subr.mxu0 0.0
          %548 = vmatpush1.msra.mxu0 0.0
          %549 = vmatprep.subr.mxu0 0.0
          %550 = vmatpush1.msra.mxu0 %v493
          %551 = vmatprep.subr.mxu0 0.0
          %552 = vmatpush1.msra.mxu0 %v492
          %553 = vmatprep.subr.mxu0 0.0
          %554 = vmatpush1.msra.mxu0 %v491
          %555 = vmatprep.subr.mxu0 0.0
          %556 = vmatpush1.msra.mxu0 %v490
          %557 = vmatprep.subr.mxu0 0.0
          %558 = vmatpush2.msra.mxu0 0.0
          %559 = vmatprep.subr.mxu0 0.0
          %560 = vmatpush2.msra.mxu0 0.0
          %561 = vmatprep.subr.mxu0 0.0
          %562 = vmatpush2.msra.mxu0 0.0
          %563 = vmatprep.subr.mxu0 0.0
          %564 = vmatpush2.msra.mxu0 0.0
          %565 = vmatprep.subr.mxu0 0.0
          %566 = vmatpush2.msra.mxu0 0.0
          %567 = vmatprep.subr.mxu0 0.0
          %568 = vmatpush2.msra.mxu0 0.0
          %569 = vmatprep.subr.mxu0 0.0
          %570 = vmatpush2.msra.mxu0 0.0
          %571 = vmatprep.subr.mxu0 0.0
          %572 = vmatpush2.msra.mxu0 0.0
          %573 = vmatprep.subr.mxu0 0.0
          %574 = vmatpush2.msra.mxu0 0.0
          %575 = vmatprep.subr.mxu0 0.0
          %576 = vmatpush2.msra.mxu0 0.0
          %577 = vmatprep.subr.mxu0 0.0
          %578 = vmatpush2.msra.mxu0 0.0
          %579 = vmatprep.subr.mxu0 0.0
          %580 = vmatpush2.msra.mxu0 0.0
          %581 = vmatprep.subr.mxu0 0.0
          %582 = vmatpush2.msra.mxu0 0.0
          %583 = vmatprep.subr.mxu0 0.0
          %584 = vmatpush2.msra.mxu0 0.0
          %585 = vmatprep.subr.mxu0 0.0
          %586 = vmatpush2.msra.mxu0 0.0
          %587 = vmatprep.subr.mxu0 0.0
          %588 = vmatpush2.msra.mxu0 0.0
          %589 = vmatprep.mubr.f32.mxu0 0.0
          %590 = vmatmul.mubr.f32.gmra.mxu0 %v502
          %v591 = vpop.f32.mrf.mxu0
          %v592 = vadd.f32 %v499, %v591
          %v593 = vpop.f32.mrf.mxu0
          %594 = vmatprep.mubr.f32.mxu0 0.0
          %595 = vmatmul.mubr.f32.gmra.mxu0 %v505
          %v596 = vpop.f32.mrf.mxu0
          %v597 = vadd.f32 %v499, %v596
          %v598 = vpop.f32.mrf.mxu0
          %599 = vmatprep.mubr.f32.mxu0 0.0
          %600 = vmatmul.mubr.f32.gmra.mxu0 %v508
          %v601 = vpop.f32.mrf.mxu0
          %v602 = vadd.f32 %v499, %v601
          %v603 = vpop.f32.mrf.mxu0
          %604 = vmatprep.mubr.f32.mxu0 0.0
          %605 = vmatmul.mubr.f32.gmra.mxu0 %v511
          %v606 = vpop.f32.mrf.mxu0
          %v607 = vadd.f32 %v499, %v606
          %v608 = vpop.f32.mrf.mxu0
          %609 = vmatprep.mubr.f32.mxu0 0.0
          %610 = vmatmul.mubr.f32.gmra.mxu0 %v514
          %v611 = vpop.f32.mrf.mxu0
          %v612 = vadd.f32 %v499, %v611
          %v613 = vpop.f32.mrf.mxu0
          %614 = vmatprep.mubr.f32.mxu0 0.0
          %615 = vmatmul.mubr.f32.gmra.mxu0 %v517
          %v616 = vpop.f32.mrf.mxu0
          %v617 = vadd.f32 %v499, %v616
          %v618 = vpop.f32.mrf.mxu0
          %619 = vmatprep.mubr.f32.mxu0 0.0
          %620 = vmatmul.mubr.f32.gmra.mxu0 %v520
          %v621 = vpop.f32.mrf.mxu0
          %v622 = vadd.f32 %v499, %v621
          %v623 = vpop.f32.mrf.mxu0
          %624 = vmatprep.mubr.f32.mxu0 0.0
          %625 = vmatmul.mubr.f32.gmra.mxu0 %v523
          %v626 = vpop.f32.mrf.mxu0
          %v627 = vadd.f32 %v499, %v626
          %v628 = vpop.f32.mrf.mxu0
          %629 = vdwg.mxu0
          %v630 = vmax.f32 %v592, 0.0
          %v631 = vmax.f32 %v597, 0.0
          %v632 = vmax.f32 %v602, 0.0
          %v633 = vmax.f32 %v607, 0.0
          %v634 = vmax.f32 %v612, 0.0
          %v635 = vmax.f32 %v617, 0.0
          %v636 = vmax.f32 %v622, 0.0
          %v637 = vmax.f32 %v627, 0.0
          %v638 = vld [vmem:[%s4] sm:$0xff]
          %v639 = vld [vmem:[%s4 + $0x8] sm:$0xff]
          %v640 = vld [vmem:[%s4 + $0x10] sm:$0xff]
          %v641 = vld [vmem:[%s4 + $0x18] sm:$0xff]
          %v642 = vld [vmem:[%s4 + $0x20] sm:$0xff]
          %v643 = vld [vmem:[%s4 + $0x28] sm:$0xff]
          %v644 = vld [vmem:[%s4 + $0x30] sm:$0xff]
          %v645 = vld [vmem:[%s4 + $0x38] sm:$0xff]
          %v646 = vmul.f32 %v630, %v638
          %v647 = vmul.f32 %v631, %v639
          %v648 = vmul.f32 %v632, %v640
          %v649 = vmul.f32 %v633, %v641
          %v650 = vmul.f32 %v634, %v642
          %v651 = vmul.f32 %v635, %v643
          %v652 = vmul.f32 %v636, %v644
          %v653 = vmul.f32 %v637, %v645
          %654 = vst [vmem:[%s255] sm:$0xff] %v646
          %655 = vst [vmem:[%s255 + $0x8] sm:$0xff] %v647
          %656 = vst [vmem:[%s255 + $0x10] sm:$0xff] %v648
          %657 = vst [vmem:[%s255 + $0x18] sm:$0xff] %v649
          %658 = vst [vmem:[%s255 + $0x20] sm:$0xff] %v650
          %659 = vst [vmem:[%s255 + $0x28] sm:$0xff] %v651
          %660 = vst [vmem:[%s255 + $0x30] sm:$0xff] %v652
          %661 = vst [vmem:[%s255 + $0x38] sm:$0xff] %v653
        $region48: #{tpu_custom_call.1} parent=39 // pred_fallthru
          _
        %s662 = sand.u32 %s156, 1
        %s663 = scalar_lea.sflag [#allocation4], %s662
        %s664 = sand.u32 %s156, 1
        %s665 = smul.addr %s664, 64
        %s666 = scalar_lea.vmem [#allocation3], %s665
        // Predicated region
        $region49: #{tpu_custom_call.1} parent=39 // pred_check
          %p667 = pneg %p166
        $region50: #{tpu_custom_call.1} parent=39 // pred_check_branch
          %669 = sbr.rel (%p667) target = $region52
        $region51: #{tpu_custom_call.1} parent=39 // pred_region
          %s671 = ssub.s32 1024, 1024
          %672 = vsyncadd %s663, %s671
          %s673 = smul.addr %s23, 8
          %s674 = smul.addr %s673, 128
          %s675 = scalar_lea.hbm %s5, %s674
          %s676 = sshll.u32 %s666, 4
          %s677 = int_to_ptr.vmem [resolvable:$true] %s676
          %682 = dma.vmem_to_hbm [thread:$0]  %s677, 1024, %s675, %s663, 128, 128, 8
        $region52: #{tpu_custom_call.1} parent=39 // pred_fallthru
          _
      $region40: #{tpu_custom_call.1} parent=5 // pred_fallthru
        _
      %p683 = scmp.le.s32.totalorder 2, %s14
      // Predicated region
      $region53: #{tpu_custom_call.1} parent=5 // pred_check
        %p684 = pneg %p683
      $region54: #{tpu_custom_call.1} parent=5 // pred_check_branch
        %686 = sbr.rel (%p684) target = $region56
      $region55: #{tpu_custom_call.1} parent=5 // pred_region
        %s687 = ssub.s32 %s14, 2
        // Predicated region
        $region57: #{tpu_custom_call.1} parent=55 // pred_check
          %p688 = pneg %p172
        $region58: #{tpu_custom_call.1} parent=55 // pred_check_branch
          %690 = sbr.rel (%p688) target = $region60
        $region59: #{tpu_custom_call.1} parent=55 // pred_region
          %s691 = sand.u32 %s157, 1
          %s692 = scalar_lea.sflag [#allocation4], %s691
          %s693 = sand.u32 %s157, 1
          %s694 = smul.addr %s693, 64
          %s695 = scalar_lea.vmem [#allocation3], %s694
          %696 = dma.done %s692, 1024
        $region60: #{tpu_custom_call.1} parent=55 // pred_fallthru
          _
      $region56: #{tpu_custom_call.1} parent=5 // pred_fallthru
        _
    $region6: #{tpu_custom_call.1} parent=1 // loop_footer
      %s18 = sadd.s32 1, %s14
    $region7: #{tpu_custom_call.1} parent=1 // loop_footer_branch
      %13 = sbr.rel target = $region3
    $region8: #{tpu_custom_call.1} parent=1 // loop_exit
      _
    %697 = vsyncpa [#allocation4], 1
    %s698 = scalar_lea.sflag [#allocation4], 1
    %699 = vsyncpa %s698, 1

</llo_original>
